<compile_context>
chip_gen: v5e
topology: v5e:2x2
jax: 0.10.0
libtpu: 0.0.40
codegen_flags: <defaults>
</compile_context>

<pallas_src>
import functools

import jax
import jax.numpy as jnp
from jax.experimental import pallas as pl
from jax.experimental.pallas import tpu as pltpu


_LANES = 128
_SUBLANES = 8


def _round_up(x, m):
    return ((x + m - 1) // m) * m


def _int_pow(x, p):
    """x**p via repeated multiplication for small integer p (VPU, not EUP)."""
    if isinstance(p, int) and 1 <= p <= 8:
        acc = x
        for _ in range(p - 1):
            acc = acc * x
        return acc
    return jnp.power(x, p)


def _tensorcores_per_device():
    """Best-effort TensorCore count of the default device (v4/v5p/v7x -> 2)."""
    try:
        kind = jax.devices()[0].device_kind.lower()
    except Exception:
        return 1
    if any(tag in kind for tag in ("v4", "v5p", "v7", "7x")):
        return 2
    return 1


def _dice_kernel(p_ref, t_ref, num_ref, den_ref, *, p_pow, tile_r, chunk_r,
                 tiles_per_split, total_rows, needs_mask):
    # Grid = (core split [parallel], batch [parallel], row tiles [arbitrary]).
    j = pl.program_id(2)

    @pl.when(j == 0)
    def _():
        num_ref[...] = jnp.zeros_like(num_ref)
        den_ref[...] = jnp.zeros_like(den_ref)

    # Row offset of this block from its *logical* tile index.  The DMA
    # index_map clamps the block index to stay in bounds, so masking here is
    # always done against the logical rows: clamped / partial blocks
    # contribute exactly the rows they own and nothing else.
    row_base = (pl.program_id(0) * tiles_per_split + j) * tile_r

    def accum(start, size, num_acc, den_acc):
        pred = p_ref[0, pl.ds(start, size), :].astype(jnp.float32)
        targ = t_ref[0, pl.ds(start, size), :].astype(jnp.float32)
        if needs_mask:
            rows = row_base + start + jax.lax.broadcasted_iota(
                jnp.int32, (size, _LANES), 0)
            valid = rows < total_rows
            pred = jnp.where(valid, pred, 0.0)
            targ = jnp.where(valid, targ, 0.0)
        k = size // _SUBLANES
        prod = (pred * targ).reshape(k, _SUBLANES, _LANES)
        dens = (_int_pow(pred, p_pow) + _int_pow(targ, p_pow)).reshape(
            k, _SUBLANES, _LANES)
        # Pure VPU cross-vreg accumulation into (8, 128); the single
        # cross-lane reduction happens once, in the wrapper.
        return (num_acc + jnp.sum(prod, axis=0),
                den_acc + jnp.sum(dens, axis=0))

    num_acc = jnp.zeros((_SUBLANES, _LANES), jnp.float32)
    den_acc = jnp.zeros((_SUBLANES, _LANES), jnp.float32)

    n_full = tile_r // chunk_r
    rem = tile_r - n_full * chunk_r

    if n_full == 1:
        num_acc, den_acc = accum(0, chunk_r, num_acc, den_acc)
    elif n_full > 1:
        def body(c, carry):
            start = pl.multiple_of(c * chunk_r, chunk_r)
            return accum(start, chunk_r, *carry)
        num_acc, den_acc = jax.lax.fori_loop(
            0, n_full, body, (num_acc, den_acc), unroll=True)
    if rem > 0:
        num_acc, den_acc = accum(n_full * chunk_r, rem, num_acc, den_acc)

    num_ref[0, 0] += num_acc
    den_ref[0, 0] += den_acc


def dice_loss(predict, target, *, p=2, smooth=1, reduction="mean",
              vmem_budget_bytes=8 * 1024 * 1024, core_split=None):
    """Pallas implementation of DiceLoss(p, smooth, reduction)."""
    assert predict.shape[0] == target.shape[0], \
        "predict & target batch size don't match"
    # Zero lane-padding / masked rows contribute 0 to num and den only if p>=1.
    assert p >= 1, "dice_loss Pallas kernel requires p >= 1"

    B = predict.shape[0]
    pred2d = predict.reshape(B, -1)
    targ2d = target.reshape(B, -1)
    F = pred2d.shape[1]

    p_item = jnp.dtype(predict.dtype).itemsize
    t_item = jnp.dtype(target.dtype).itemsize
    max_item = max(p_item, t_item)
    # Native sublane tile of the narrowest input dtype (8/16/32 rows for
    # 4/2/1-byte elements) so packed sub-32-bit blocks keep their layout.
    sublane_mult = max(max(8, 32 // p_item), max(8, 32 // t_item))

    # Feature rows of 128 lanes.  Pad only up to the lane boundary (and to at
    # least one sublane tile); any remaining raggedness on the row axis is
    # handled by the in-kernel mask on the partial last block with no copy.
    R = pl.cdiv(F, _LANES)
    R = max(R, sublane_mult)
    F_pad = R * _LANES
    if F_pad != F:
        # TODO(synk): for F % 128 != 0 this jnp.pad is still a full HBM copy of
        # both inputs; a memory_space=pl.ANY manual-DMA kernel with a masked
        # final chunk would remove it.
        pad = ((0, 0), (0, F_pad - F))
        pred2d = jnp.pad(pred2d, pad)   # zeros are exact for dice with p >= 1
        targ2d = jnp.pad(targ2d, pad)

    pred3d = pred2d.reshape(B, R, _LANES)   # pure bitcast when F_pad == F
    targ3d = targ2d.reshape(B, R, _LANES)

    # Row-tile size: largest tile whose 2 inputs x 2 pipeline buffers fit the
    # VMEM budget (counting the wider input dtype), then adapted so the grid
    # covers R with at most one partial (masked) block and no padding.
    bytes_per_row = 2 * 2 * _LANES * max_item
    max_tile_r = max(sublane_mult,
                     (vmem_budget_bytes // bytes_per_row)
                     // sublane_mult * sublane_mult)
    max_tile_r = min(max_tile_r, 8192)

    n_tiles = pl.cdiv(R, max_tile_r)
    tile_r = _round_up(pl.cdiv(R, n_tiles), sublane_mult)
    tile_r = min(tile_r, (R // sublane_mult) * sublane_mult)  # block <= array
    n_tiles = pl.cdiv(R, tile_r)
    chunk_r = min(512, tile_r)   # in-kernel fused-accumulation sub-chunk

    # Optional TensorCore split of the row-tile axis (2-TC chips) when the
    # batch axis alone cannot feed every core.
    if core_split is None:
        cores = _tensorcores_per_device()
        core_split = cores if (cores > 1 and B % cores != 0
                               and n_tiles >= cores) else 1
    n_split = max(1, min(int(core_split), n_tiles))
    tiles_per_split = pl.cdiv(n_tiles, n_split)
    needs_mask = n_split * tiles_per_split * tile_r > R

    grid = (n_split, B, tiles_per_split)

    def in_index_map(s, b, j):
        # Clamp so duplicated / trailing tiles never index past the array;
        # their rows are zeroed by the in-kernel (logical-index) mask.
        return (b, jnp.minimum(s * tiles_per_split + j, n_tiles - 1), 0)

    kernel = functools.partial(
        _dice_kernel, p_pow=p, tile_r=tile_r, chunk_r=chunk_r,
        tiles_per_split=tiles_per_split, total_rows=R, needs_mask=needs_mask)

    part_num, part_den = pl.pallas_call(
        kernel,
        out_shape=(
            jax.ShapeDtypeStruct((n_split, B, _SUBLANES, _LANES), jnp.float32),
            jax.ShapeDtypeStruct((n_split, B, _SUBLANES, _LANES), jnp.float32),
        ),
        grid_spec=pltpu.PrefetchScalarGridSpec(
            num_scalar_prefetch=0,
            grid=grid,
            in_specs=[
                pl.BlockSpec((1, tile_r, _LANES), in_index_map),
                pl.BlockSpec((1, tile_r, _LANES), in_index_map),
            ],
            out_specs=(
                pl.BlockSpec((1, 1, _SUBLANES, _LANES),
                             lambda s, b, j: (s, b, 0, 0)),
                pl.BlockSpec((1, 1, _SUBLANES, _LANES),
                             lambda s, b, j: (s, b, 0, 0)),
            ),
        ),
        compiler_params=pltpu.CompilerParams(
            dimension_semantics=("parallel", "parallel", "arbitrary"),
            vmem_limit_bytes=32 * 1024 * 1024,   # <= 48 MiB, safe on v7x too
        ),
    )(pred3d, targ3d)

    # Final tiny reduction + loss in plain JAX so the parallel grid axes never
    # funnel into a single scalar output block.
    num = part_num.sum(axis=(0, 2, 3)) + jnp.float32(smooth)
    den = part_den.sum(axis=(0, 2, 3)) + jnp.float32(smooth)
    loss = 1.0 - num / den
    if reduction == "mean":
        return loss.mean()
    elif reduction == "sum":
        return loss.sum()
    elif reduction == "none":
        return loss
    raise Exception("Unexpected reduction {}".format(reduction))


def dice_loss_ref(predict, target, *, p=2, smooth=1, reduction="mean"):
    B = predict.shape[0]
    pred2d = predict.reshape(B, -1).astype(jnp.float32)
    targ2d = target.reshape(B, -1).astype(jnp.float32)
    num = jnp.sum(pred2d * targ2d, axis=1) + smooth
    den = jnp.sum(jnp.power(pred2d, p) + jnp.power(targ2d, p), axis=1) + smooth
    loss = 1.0 - num / den
    if reduction == "mean":
        return loss.mean()
    if reduction == "sum":
        return loss.sum()
    return loss


def _check(name, out, ref, atol=1e-4, rtol=1e-4):
    assert jnp.allclose(out, ref, atol=atol, rtol=rtol), (name, out, ref)


if __name__ == "__main__":
    key = jax.random.PRNGKey(0)
    keys = jax.random.split(key, 10)

    # 1) NCHW, F = 1024 (128-aligned: zero wrapper-side copies).
    predict = jax.nn.sigmoid(jax.random.normal(keys[0], (2, 4, 16, 16), jnp.float32))
    target = (jax.random.uniform(keys[1], (2, 4, 16, 16)) > 0.5).astype(jnp.float32)
    out = jax.block_until_ready(dice_loss(predict, target))
    _check("aligned", out, dice_loss_ref(predict, target))

    # 2) Non-128-divisible feature count (small lane pad path).
    predict2 = jax.nn.sigmoid(jax.random.normal(keys[2], (2, 3, 7, 5), jnp.float32))
    target2 = (jax.random.uniform(keys[3], (2, 3, 7, 5)) > 0.5).astype(jnp.float32)
    out2 = jax.block_until_ready(dice_loss(predict2, target2))
    _check("unaligned-small", out2, dice_loss_ref(predict2, target2))

    # 3) Mixed compact dtypes: bf16 predictions, f32 targets.
    predict3 = jax.nn.sigmoid(
        jax.random.normal(keys[4], (2, 4, 16, 16), jnp.float32)).astype(jnp.bfloat16)
    target3 = (jax.random.uniform(keys[5], (2, 4, 16, 16)) > 0.5).astype(jnp.float32)
    out3 = jax.block_until_ready(dice_loss(predict3, target3))
    _check("bf16-mixed", out3, dice_loss_ref(predict3, target3))

    # 4) Larger aligned case: exercises the chunked in-kernel accumulation.
    predict4 = jax.nn.sigmoid(jax.random.normal(keys[6], (2, 8, 96, 96), jnp.float32))
    target4 = (jax.random.uniform(keys[7], (2, 8, 96, 96)) > 0.5).astype(jnp.float32)
    out4 = jax.block_until_ready(dice_loss(predict4, target4))
    _check("chunked", out4, dice_loss_ref(predict4, target4))

    # 5) Forced 2-way TensorCore split + partial (masked) last row block.
    predict5 = jax.nn.sigmoid(jax.random.normal(keys[8], (1, 3, 56, 56), jnp.float32))
    target5 = (jax.random.uniform(keys[9], (1, 3, 56, 56)) > 0.5).astype(jnp.float32)
    out5 = jax.block_until_ready(dice_loss(predict5, target5, core_split=2))
    _check("core-split+mask", out5, dice_loss_ref(predict5, target5))

    print("KERNEL_OK")
</pallas_src>

<mosaic_0001>
module attributes {stable_mosaic.version = 11 : i64} {
  func.func @_dice_kernel(%arg0: i32, %arg1: i32, %arg2: i32, %arg3: memref<1x8x128xf32, #tpu.memory_space<vmem>>, %arg4: memref<1x8x128xf32, #tpu.memory_space<vmem>>, %arg5: memref<1x1x8x128xf32, #tpu.memory_space<vmem>>, %arg6: memref<1x1x8x128xf32, #tpu.memory_space<vmem>>) attributes {dimension_semantics = [#tpu.dimension_semantics<parallel>, #tpu.dimension_semantics<parallel>, #tpu.dimension_semantics<arbitrary>], iteration_bounds = array<i64: 1, 2, 1>, scalar_prefetch = 0 : i64, scratch_operands = 0 : i64, tpu.core_type = #tpu.core_type<tc>, window_params = [{transform_indices = @transform_0, window_bounds = array<i64: 1, 8, 128>}, {transform_indices = @transform_1, window_bounds = array<i64: 1, 8, 128>}, {transform_indices = @transform_2, window_bounds = array<i64: 1, 1, 8, 128>}, {transform_indices = @transform_3, window_bounds = array<i64: 1, 1, 8, 128>}]} {
    %c0_i32 = arith.constant 0 : i32
    %0 = arith.cmpi eq, %arg2, %c0_i32 : i32
    %1 = arith.extui %0 : i1 to i32
    %c0_i32_0 = arith.constant 0 : i32
    %2 = arith.cmpi ne, %1, %c0_i32_0 : i32
    scf.if %2 {
      %cst_25 = arith.constant 0.000000e+00 : f32
      %31 = vector.broadcast %cst_25 : f32 to vector<1x1x8x128xf32>
      %c0_26 = arith.constant 0 : index
      %c0_27 = arith.constant 0 : index
      %c0_28 = arith.constant 0 : index
      %c0_29 = arith.constant 0 : index
      %32 = vector.load %arg5[%c0_26, %c0_27, %c0_28, %c0_29] : memref<1x1x8x128xf32, #tpu.memory_space<vmem>>, vector<1x1x8x128xf32>
      tpu.vector_store %arg5[%c0_26, %c0_27, %c0_28, %c0_29], %31 {strides = array<i32>} : memref<1x1x8x128xf32, #tpu.memory_space<vmem>>, vector<1x1x8x128xf32>,
      %cst_30 = arith.constant 0.000000e+00 : f32
      %33 = vector.broadcast %cst_30 : f32 to vector<1x1x8x128xf32>
      %c0_31 = arith.constant 0 : index
      %c0_32 = arith.constant 0 : index
      %c0_33 = arith.constant 0 : index
      %c0_34 = arith.constant 0 : index
      %34 = vector.load %arg6[%c0_31, %c0_32, %c0_33, %c0_34] : memref<1x1x8x128xf32, #tpu.memory_space<vmem>>, vector<1x1x8x128xf32>
      tpu.vector_store %arg6[%c0_31, %c0_32, %c0_33, %c0_34], %33 {strides = array<i32>} : memref<1x1x8x128xf32, #tpu.memory_space<vmem>>, vector<1x1x8x128xf32>,
    } else {
    }
    %cst = arith.constant 0.000000e+00 : f32
    %3 = vector.broadcast %cst : f32 to vector<8x128xf32>
    %cst_1 = arith.constant 0.000000e+00 : f32
    %4 = vector.broadcast %cst_1 : f32 to vector<8x128xf32>
    %c0 = arith.constant 0 : index
    %c0_2 = arith.constant 0 : index
    %c0_3 = arith.constant 0 : index
    %5 = vector.load %arg3[%c0, %c0_2, %c0_3] : memref<1x8x128xf32, #tpu.memory_space<vmem>>, vector<1x8x128xf32>
    %6 = vector.shape_cast %5 : vector<1x8x128xf32> to vector<8x128xf32>
    %c0_4 = arith.constant 0 : index
    %c0_5 = arith.constant 0 : index
    %c0_6 = arith.constant 0 : index
    %7 = vector.load %arg4[%c0_4, %c0_5, %c0_6] : memref<1x8x128xf32, #tpu.memory_space<vmem>>, vector<1x8x128xf32>
    %8 = vector.shape_cast %7 : vector<1x8x128xf32> to vector<8x128xf32>
    %9 = arith.mulf %6, %8 : vector<8x128xf32>
    %10 = vector.shape_cast %9 : vector<8x128xf32> to vector<1x8x128xf32>
    %11 = arith.mulf %6, %6 : vector<8x128xf32>
    %12 = arith.mulf %8, %8 : vector<8x128xf32>
    %13 = arith.addf %11, %12 : vector<8x128xf32>
    %14 = vector.shape_cast %13 : vector<8x128xf32> to vector<1x8x128xf32>
    %cst_7 = arith.constant dense<0.000000e+00> : vector<8x128xf32>
    %15 = vector.multi_reduction <add>, %10, %cst_7 [0] : vector<1x8x128xf32> to vector<8x128xf32>
    %16 = arith.addf %3, %15 : vector<8x128xf32>
    %cst_8 = arith.constant dense<0.000000e+00> : vector<8x128xf32>
    %17 = vector.multi_reduction <add>, %14, %cst_8 [0] : vector<1x8x128xf32> to vector<8x128xf32>
    %18 = arith.addf %4, %17 : vector<8x128xf32>
    %c0_9 = arith.constant 0 : index
    %c0_10 = arith.constant 0 : index
    %c0_11 = arith.constant 0 : index
    %c0_12 = arith.constant 0 : index
    %19 = vector.load %arg5[%c0_9, %c0_10, %c0_11, %c0_12] : memref<1x1x8x128xf32, #tpu.memory_space<vmem>>, vector<1x1x8x128xf32>
    %20 = vector.shape_cast %19 : vector<1x1x8x128xf32> to vector<8x128xf32>
    %21 = arith.addf %20, %16 : vector<8x128xf32>
    %c0_13 = arith.constant 0 : index
    %c0_14 = arith.constant 0 : index
    %c0_15 = arith.constant 0 : index
    %c0_16 = arith.constant 0 : index
    %22 = vector.load %arg5[%c0_13, %c0_14, %c0_15, %c0_16] : memref<1x1x8x128xf32, #tpu.memory_space<vmem>>, vector<1x1x8x128xf32>
    %23 = vector.shape_cast %22 : vector<1x1x8x128xf32> to vector<8x128xf32>
    %24 = vector.shape_cast %21 : vector<8x128xf32> to vector<1x1x8x128xf32>
    tpu.vector_store %arg5[%c0_13, %c0_14, %c0_15, %c0_16], %24 {strides = array<i32>} : memref<1x1x8x128xf32, #tpu.memory_space<vmem>>, vector<1x1x8x128xf32>,
    %c0_17 = arith.constant 0 : index
    %c0_18 = arith.constant 0 : index
    %c0_19 = arith.constant 0 : index
    %c0_20 = arith.constant 0 : index
    %25 = vector.load %arg6[%c0_17, %c0_18, %c0_19, %c0_20] : memref<1x1x8x128xf32, #tpu.memory_space<vmem>>, vector<1x1x8x128xf32>
    %26 = vector.shape_cast %25 : vector<1x1x8x128xf32> to vector<8x128xf32>
    %27 = arith.addf %26, %18 : vector<8x128xf32>
    %c0_21 = arith.constant 0 : index
    %c0_22 = arith.constant 0 : index
    %c0_23 = arith.constant 0 : index
    %c0_24 = arith.constant 0 : index
    %28 = vector.load %arg6[%c0_21, %c0_22, %c0_23, %c0_24] : memref<1x1x8x128xf32, #tpu.memory_space<vmem>>, vector<1x1x8x128xf32>
    %29 = vector.shape_cast %28 : vector<1x1x8x128xf32> to vector<8x128xf32>
    %30 = vector.shape_cast %27 : vector<8x128xf32> to vector<1x1x8x128xf32>
    tpu.vector_store %arg6[%c0_21, %c0_22, %c0_23, %c0_24], %30 {strides = array<i32>} : memref<1x1x8x128xf32, #tpu.memory_space<vmem>>, vector<1x1x8x128xf32>,
    return
  }
  func.func @transform_0(%arg0: i32, %arg1: i32, %arg2: i32) -> (i32, i32, i32) {
    %c1_i32 = arith.constant 1 : i32
    %0 = arith.muli %arg0, %c1_i32 : i32
    %1 = arith.addi %0, %arg2 : i32
    %c0_i32 = arith.constant 0 : i32
    %2 = arith.minsi %1, %c0_i32 : i32
    %c0_i32_0 = arith.constant 0 : i32
    %c0_i32_1 = arith.constant 0 : i32
    return %arg1, %2, %c0_i32_0 : i32, i32, i32
  }
  func.func @transform_1(%arg0: i32, %arg1: i32, %arg2: i32) -> (i32, i32, i32) {
    %c1_i32 = arith.constant 1 : i32
    %0 = arith.muli %arg0, %c1_i32 : i32
    %1 = arith.addi %0, %arg2 : i32
    %c0_i32 = arith.constant 0 : i32
    %2 = arith.minsi %1, %c0_i32 : i32
    %c0_i32_0 = arith.constant 0 : i32
    %c0_i32_1 = arith.constant 0 : i32
    return %arg1, %2, %c0_i32_0 : i32, i32, i32
  }
  func.func @transform_2(%arg0: i32, %arg1: i32, %arg2: i32) -> (i32, i32, i32, i32) {
    %c0_i32 = arith.constant 0 : i32
    %c0_i32_0 = arith.constant 0 : i32
    %c0_i32_1 = arith.constant 0 : i32
    return %arg0, %arg1, %c0_i32, %c0_i32_0 : i32, i32, i32, i32
  }
  func.func @transform_3(%arg0: i32, %arg1: i32, %arg2: i32) -> (i32, i32, i32, i32) {
    %c0_i32 = arith.constant 0 : i32
    %c0_i32_0 = arith.constant 0 : i32
    %c0_i32_1 = arith.constant 0 : i32
    return %arg0, %arg1, %c0_i32, %c0_i32_0 : i32, i32, i32, i32
  }
}

</mosaic_0001>

<llo_original>
// kernel: tpu_custom_call.1
$region0: #{tpu_custom_call.1}
  #allocation0 [shape = 'u32[]', space=smem, size = 0x4, offset = 0x4, fixed_abs, tag = 'smem constant byte address 0x4 - core index']
  #allocation1 [shape = 'u32[72,128]{1,0:T(1,128)}', space=vmem, size = 0x9000, scoped, tag = 'internal scratch']
  %s0 = inlined_call_operand.hbm [shape: f32[2,8,128], index: 0, kind: input, shape index: {}]
  %s1 = inlined_call_operand.hbm [shape: f32[2,8,128], index: 1, kind: input, shape index: {}]
  %s2 = inlined_call_operand.hbm [shape: f32[1,2,8,128], index: 2, kind: output, shape index: {0}]
  %s3 = inlined_call_operand.hbm [shape: f32[1,2,8,128], index: 3, kind: output, shape index: {1}]
  %4 = xla_tuple %s2, %s3
  %s5 = sld [smem:[#allocation0]]
  $region61: #{tpu_custom_call.1} parent=0
    _
  %s7 = ssub.s32 1, %s5
  %s8 = scalar_select 0, %s7, %s5
  $region1: #{tpu_custom_call.1} parent=0
    #allocation2 [shape = 'u8[8192]{0}', space=vmem, size = 0x2000, scoped, tag = 'input window, operand 0']
    #allocation3 [shape = 's32[2]{0}', space=sflag, size = 0x8, scoped, tag = 'scoped memory for tpu_custom_call.1']
    #allocation4 [shape = 's32[2]{0}', space=sflag, size = 0x8, scoped, tag = 'scoped memory for tpu_custom_call.1']
    #allocation5 [shape = 'u8[8192]{0}', space=vmem, size = 0x2000, scoped, tag = 'input window, operand 1']
    #allocation6 [shape = 's32[2]{0}', space=sflag, size = 0x8, scoped, tag = 'scoped memory for tpu_custom_call.1']
    #allocation7 [shape = 'u8[8192]{0}', space=vmem, size = 0x2000, scoped, tag = 'output window, operand 0']
    #allocation8 [shape = 'u8[8192]{0}', space=vmem, size = 0x2000, scoped, tag = 'output window, operand 1']
    #allocation9 [shape = 's32[2]{0}', space=sflag, size = 0x8, scoped, tag = 'scoped memory for tpu_custom_call.1']
    %9 = vsyncpa [#allocation3], 0
    %s10 = scalar_lea.sflag [#allocation3], 1
    %11 = vsyncpa %s10, 0
    %12 = vsyncpa [#allocation6], 0
    %s13 = scalar_lea.sflag [#allocation6], 1
    %14 = vsyncpa %s13, 0
    %15 = vsyncpa [#allocation4], 0
    %s16 = scalar_lea.sflag [#allocation4], 1
    %17 = vsyncpa %s16, 0
    %18 = vsyncpa [#allocation9], 0
    %s19 = scalar_lea.sflag [#allocation9], 1
    %20 = vsyncpa %s19, 0
    loop: start=0, step=1, limit=4
    $region2: #{tpu_custom_call.1} parent=1 // loop_pre_header
      _
    $region3: #{tpu_custom_call.1} parent=1 // loop_header
      %s22 = sphi 0, %s26
      %p23 = scmp.ge.s32.totalorder %s22, 4
      %s29 = sphi 0, %s48
      %s30 = sphi 0, %s44
      %s31 = sphi 0, %s40
      %s32 = sphi 0, %s29
      %s33 = sphi 0, %s30
      %s34 = sphi 0, %s31
      %s35 = sphi 0, %s32
      %s36 = sphi 0, %s33
      %s37 = sphi 0, %s34
      %s59 = sphi 0, %s61
      %s62 = sphi 0, %s59
      %s63 = sphi 0, %s62
      %s79 = sphi 0, %s63
      %s93 = sphi 0, %s95
      %s96 = sphi 0, %s93
      %s97 = sphi 0, %s96
      %s113 = sphi 0, %s97
      %s121 = sphi 0, %s123
      %s124 = sphi 0, %s121
      %s125 = sphi 0, %s124
      %s141 = sphi 0, %s125
      %s149 = sphi 0, %s151
      %s152 = sphi 0, %s149
      %s153 = sphi 0, %s152
      %s169 = sphi 0, %s153
    $region4: #{tpu_custom_call.1} parent=1 // loop_header_branch
      %25 = sbr.rel (%p23) target = $region8
    $region5: #{tpu_custom_call.1} parent=1 // loop_body
      %s27 = ssub.s32 %s22, 1
      %s28 = ssub.s32 %s22, 2
      %s38 = sadd.s32 1, %s31
      %p39 = scmp.ge.s32.totalorder %s38, 1
      %s40 = scalar_select %p39, 0, %s38
      %s41 = sadd.s32 1, %s30
      %s42 = scalar_select %p39, %s41, %s30
      %p43 = scmp.ge.s32.totalorder %s42, 2
      %s44 = scalar_select %p43, 0, %s42
      %s45 = sadd.s32 1, %s29
      %s46 = scalar_select %p43, %s45, %s29
      %p47 = scmp.ge.s32.totalorder %s46, 1
      %s48 = scalar_select %p47, 0, %s46
      %s49 = sadd.s32 %s29, %s31
      %p50 = scmp.lt.s32.totalorder %s49, 0
      %s51 = scalar_select %p50, %s49, 0
      %s52 = sadd.s32 %s48, %s40
      %p53 = scmp.lt.s32.totalorder %s52, 0
      %s54 = scalar_select %p53, %s52, 0
      %s55 = ssub.s32 %s30, %s44
      %s56 = ssub.s32 %s51, %s54
      %s57 = sor.u32 %s55, %s56
      %p58 = scmp.eq.s32.totalorder %s57, 0
      %s60 = sadd.s32 %s59, 1
      %s61 = scalar_select %p58, %s59, %s60
      %p64 = pneg %p58
      %p65 = scmp.eq.s32.totalorder %s22, 1
      %p66 = por %p64, %p65
      %p67 = scmp.ne.s32.totalorder %s59, %s62
      %p68 = scmp.eq.s32.totalorder %s22, 0
      %p69 = por %p67, %p68
      %p70 = scmp.ne.s32.totalorder %s59, %s62
      %p71 = scmp.eq.s32.totalorder %s27, 1
      %p72 = por %p70, %p71
      %p73 = scmp.ne.s32.totalorder %s62, %s63
      %p74 = scmp.eq.s32.totalorder %s27, 0
      %p75 = por %p73, %p74
      %p76 = scmp.ne.s32.totalorder %s62, %s63
      %p77 = scmp.eq.s32.totalorder %s28, 1
      %p78 = por %p76, %p77
      %p80 = scmp.ne.s32.totalorder %s63, %s79
      %p81 = scmp.eq.s32.totalorder %s28, 0
      %p82 = por %p80, %p81
      %s83 = sadd.s32 %s29, %s31
      %p84 = scmp.lt.s32.totalorder %s83, 0
      %s85 = scalar_select %p84, %s83, 0
      %s86 = sadd.s32 %s48, %s40
      %p87 = scmp.lt.s32.totalorder %s86, 0
      %s88 = scalar_select %p87, %s86, 0
      %s89 = ssub.s32 %s30, %s44
      %s90 = ssub.s32 %s85, %s88
      %s91 = sor.u32 %s89, %s90
      %p92 = scmp.eq.s32.totalorder %s91, 0
      %s94 = sadd.s32 %s93, 1
      %s95 = scalar_select %p92, %s93, %s94
      %p98 = pneg %p92
      %p99 = scmp.eq.s32.totalorder %s22, 1
      %p100 = por %p98, %p99
      %p101 = scmp.ne.s32.totalorder %s93, %s96
      %p102 = scmp.eq.s32.totalorder %s22, 0
      %p103 = por %p101, %p102
      %p104 = scmp.ne.s32.totalorder %s93, %s96
      %p105 = scmp.eq.s32.totalorder %s27, 1
      %p106 = por %p104, %p105
      %p107 = scmp.ne.s32.totalorder %s96, %s97
      %p108 = scmp.eq.s32.totalorder %s27, 0
      %p109 = por %p107, %p108
      %p110 = scmp.ne.s32.totalorder %s96, %s97
      %p111 = scmp.eq.s32.totalorder %s28, 1
      %p112 = por %p110, %p111
      %p114 = scmp.ne.s32.totalorder %s97, %s113
      %p115 = scmp.eq.s32.totalorder %s28, 0
      %p116 = por %p114, %p115
      %s117 = ssub.s32 %s29, %s48
      %s118 = ssub.s32 %s30, %s44
      %s119 = sor.u32 %s117, %s118
      %p120 = scmp.eq.s32.totalorder %s119, 0
      %s122 = sadd.s32 %s121, 1
      %s123 = scalar_select %p120, %s121, %s122
      %p126 = pneg %p120
      %p127 = scmp.eq.s32.totalorder %s22, 1
      %p128 = por %p126, %p127
      %p129 = scmp.ne.s32.totalorder %s121, %s124
      %p130 = scmp.eq.s32.totalorder %s22, 0
      %p131 = por %p129, %p130
      %p132 = scmp.ne.s32.totalorder %s121, %s124
      %p133 = scmp.eq.s32.totalorder %s27, 1
      %p134 = por %p132, %p133
      %p135 = scmp.ne.s32.totalorder %s124, %s125
      %p136 = scmp.eq.s32.totalorder %s27, 0
      %p137 = por %p135, %p136
      %p138 = scmp.ne.s32.totalorder %s124, %s125
      %p139 = scmp.eq.s32.totalorder %s28, 1
      %p140 = por %p138, %p139
      %p142 = scmp.ne.s32.totalorder %s125, %s141
      %p143 = scmp.eq.s32.totalorder %s28, 0
      %p144 = por %p142, %p143
      %s145 = ssub.s32 %s29, %s48
      %s146 = ssub.s32 %s30, %s44
      %s147 = sor.u32 %s145, %s146
      %p148 = scmp.eq.s32.totalorder %s147, 0
      %s150 = sadd.s32 %s149, 1
      %s151 = scalar_select %p148, %s149, %s150
      %p154 = pneg %p148
      %p155 = scmp.eq.s32.totalorder %s22, 1
      %p156 = por %p154, %p155
      %p157 = scmp.ne.s32.totalorder %s149, %s152
      %p158 = scmp.eq.s32.totalorder %s22, 0
      %p159 = por %p157, %p158
      %p160 = scmp.ne.s32.totalorder %s149, %s152
      %p161 = scmp.eq.s32.totalorder %s27, 1
      %p162 = por %p160, %p161
      %p163 = scmp.ne.s32.totalorder %s152, %s153
      %p164 = scmp.eq.s32.totalorder %s27, 0
      %p165 = por %p163, %p164
      %p166 = scmp.ne.s32.totalorder %s152, %s153
      %p167 = scmp.eq.s32.totalorder %s28, 1
      %p168 = por %p166, %p167
      %p170 = scmp.ne.s32.totalorder %s153, %s169
      %p171 = scmp.eq.s32.totalorder %s28, 0
      %p172 = por %p170, %p171
      %p173 = scmp.le.s32.totalorder 1, %s22
      %p174 = scmp.lt.s32.totalorder %s22, 3
      %p175 = pnand %p173, %p174
      %p176 = pneg %p175
      // Predicated region
      $region9: #{tpu_custom_call.1} parent=5 // pred_check
        _
      $region10: #{tpu_custom_call.1} parent=5 // pred_check_branch
        %178 = sbr.rel (%p175) target = $region12
      $region11: #{tpu_custom_call.1} parent=5 // pred_region
        %s179 = ssub.s32 %s22, 1
      $region12: #{tpu_custom_call.1} parent=5 // pred_fallthru
        _
      %p180 = scmp.lt.s32.totalorder %s22, 2
      // Predicated region
      $region13: #{tpu_custom_call.1} parent=5 // pred_check
        %p181 = pneg %p180
      $region14: #{tpu_custom_call.1} parent=5 // pred_check_branch
        %183 = sbr.rel (%p181) target = $region16
      $region15: #{tpu_custom_call.1} parent=5 // pred_region
        // Predicated region
        $region17: #{tpu_custom_call.1} parent=15 // pred_check
          %p184 = pneg %p69
        $region18: #{tpu_custom_call.1} parent=15 // pred_check_branch
          %186 = sbr.rel (%p184) target = $region20
        $region19: #{tpu_custom_call.1} parent=15 // pred_region
          %s187 = sand.u32 %s59, 1
          %s188 = scalar_lea.sflag [#allocation3], %s187
          %s189 = sand.u32 %s59, 1
          %s190 = smul.addr %s189, 8
          %s191 = scalar_lea.vmem [#allocation2], %s190
          %s192 = sadd.s32 %s29, %s31
          %p193 = scmp.lt.s32.totalorder %s192, 0
          %s194 = scalar_select %p193, %s192, 0
          %196 = vsyncadd %s188, 0
          %s197 = sadd.s32 %s194, %s30
          %s198 = smul.addr %s197, 8
          %s199 = scalar_lea.hbm %s0, %s198
          %s201 = sshll.u32 %s199, 4
          %s202 = int_to_ptr.hbm [resolvable:$true] %s201
          %s203 = sshll.u32 %s191, 4
          %s204 = int_to_ptr.vmem [resolvable:$true] %s203
          %206 = dma.hbm_to_vmem [thread:$0]  %s202, 128, %s204, %s188
        $region20: #{tpu_custom_call.1} parent=15 // pred_fallthru
          _
        // Predicated region
        $region21: #{tpu_custom_call.1} parent=15 // pred_check
          %p207 = pneg %p103
        $region22: #{tpu_custom_call.1} parent=15 // pred_check_branch
          %209 = sbr.rel (%p207) target = $region24
        $region23: #{tpu_custom_call.1} parent=15 // pred_region
          %s210 = sand.u32 %s93, 1
          %s211 = scalar_lea.sflag [#allocation6], %s210
          %s212 = sand.u32 %s93, 1
          %s213 = smul.addr %s212, 8
          %s214 = scalar_lea.vmem [#allocation5], %s213
          %s215 = sadd.s32 %s29, %s31
          %p216 = scmp.lt.s32.totalorder %s215, 0
          %s217 = scalar_select %p216, %s215, 0
          %219 = vsyncadd %s211, 0
          %s220 = sadd.s32 %s217, %s30
          %s221 = smul.addr %s220, 8
          %s222 = scalar_lea.hbm %s1, %s221
          %s224 = sshll.u32 %s222, 4
          %s225 = int_to_ptr.hbm [resolvable:$true] %s224
          %s226 = sshll.u32 %s214, 4
          %s227 = int_to_ptr.vmem [resolvable:$true] %s226
          %229 = dma.hbm_to_vmem [thread:$0]  %s225, 128, %s227, %s211
        $region24: #{tpu_custom_call.1} parent=15 // pred_fallthru
          _
      $region16: #{tpu_custom_call.1} parent=5 // pred_fallthru
        _
      %p230 = scmp.le.s32.totalorder 1, %s22
      %p231 = scmp.lt.s32.totalorder %s22, 3
      %p232 = pnand %p230, %p231
      %p233 = pneg %p232
      // Predicated region
      $region25: #{tpu_custom_call.1} parent=5 // pred_check
        _
      $region26: #{tpu_custom_call.1} parent=5 // pred_check_branch
        %235 = sbr.rel (%p232) target = $region28
      $region27: #{tpu_custom_call.1} parent=5 // pred_region
        %s236 = ssub.s32 %s22, 1
        %s237 = sand.u32 %s62, 1
        %s238 = scalar_lea.sflag [#allocation3], %s237
        %s239 = sand.u32 %s62, 1
        %s240 = smul.addr %s239, 8
        %s241 = scalar_lea.vmem [#allocation2], %s240
        // Predicated region
        $region29: #{tpu_custom_call.1} parent=27 // pred_check
          %p242 = pneg %p75
        $region30: #{tpu_custom_call.1} parent=27 // pred_check_branch
          %244 = sbr.rel (%p242) target = $region32
        $region31: #{tpu_custom_call.1} parent=27 // pred_region
          %246 = dma.done %s238, 128
        $region32: #{tpu_custom_call.1} parent=27 // pred_fallthru
          _
        %s247 = sand.u32 %s96, 1
        %s248 = scalar_lea.sflag [#allocation6], %s247
        %s249 = sand.u32 %s96, 1
        %s250 = smul.addr %s249, 8
        %s251 = scalar_lea.vmem [#allocation5], %s250
        // Predicated region
        $region33: #{tpu_custom_call.1} parent=27 // pred_check
          %p252 = pneg %p109
        $region34: #{tpu_custom_call.1} parent=27 // pred_check_branch
          %254 = sbr.rel (%p252) target = $region36
        $region35: #{tpu_custom_call.1} parent=27 // pred_region
          %256 = dma.done %s248, 128
        $region36: #{tpu_custom_call.1} parent=27 // pred_fallthru
          _
        %s257 = sand.u32 %s62, 1
        %s258 = scalar_lea.sflag [#allocation3], %s257
        %s259 = sand.u32 %s62, 1
        %s260 = smul.addr %s259, 8
        %s261 = scalar_lea.vmem [#allocation2], %s260
        %p262 = pneg %p75
        %p263 = pneg %p72
        %s264 = sand.u32 %s96, 1
        %s265 = scalar_lea.sflag [#allocation6], %s264
        %s266 = sand.u32 %s96, 1
        %s267 = smul.addr %s266, 8
        %s268 = scalar_lea.vmem [#allocation5], %s267
        %p269 = pneg %p109
        %p270 = pneg %p106
        %p271 = pneg %p137
        %p272 = pneg %p134
        %s273 = sand.u32 %s124, 1
        %s274 = scalar_lea.sflag [#allocation4], %s273
        %s275 = sand.u32 %s124, 1
        %s276 = smul.addr %s275, 8
        %s277 = scalar_lea.vmem [#allocation7], %s276
        %p278 = pneg %p165
        %p279 = pneg %p162
        %s280 = sand.u32 %s152, 1
        %s281 = scalar_lea.sflag [#allocation9], %s280
        %s282 = sand.u32 %s152, 1
        %s283 = smul.addr %s282, 8
        %s284 = scalar_lea.vmem [#allocation8], %s283
        %s285 = sadd.s32 %s32, %s34
        %p286 = scmp.lt.s32.totalorder %s285, 0
        %s287 = scalar_select %p286, %s285, 0
        %s288 = sadd.s32 %s32, %s34
        %p289 = scmp.lt.s32.totalorder %s288, 0
        %s290 = scalar_select %p289, %s288, 0
        %p291 = scmp.eq.s32.totalorder %s34, 0
        // Predicated region
        $region37: #{tpu_custom_call.1} parent=27 // pred_check
          %p292 = pneg %p291
        $region38: #{tpu_custom_call.1} parent=27 // pred_check_branch
          %294 = sbr.rel (%p292) target = $region40
        $region39: #{tpu_custom_call.1} parent=27 // pred_region
          %295 = vst [vmem:[%s277] sm:$0xff] 0.0
          %296 = vst [vmem:[%s284] sm:$0xff] 0.0
        $region40: #{tpu_custom_call.1} parent=27 // pred_fallthru
          _
        %v297 = vld [vmem:[%s241] sm:$0xff]
        %v298 = vld [vmem:[%s251] sm:$0xff]
        %v299 = vmul.f32 %v297, %v298
        %v300 = vmul.f32 %v297, %v297
        %v301 = vmul.f32 %v298, %v298
        %v302 = vadd.f32 %v300, %v301
        %v303 = vadd.f32 %v299, 0.0
        %v304 = vadd.f32 %v303, 0.0
        %v305 = vadd.f32 %v302, 0.0
        %v306 = vadd.f32 %v305, 0.0
        %v307 = vld [vmem:[%s277] sm:$0xff]
        %v308 = vadd.f32 %v307, %v304
        %309 = vst [vmem:[%s277] sm:$0xff] %v308
        %v310 = vld [vmem:[%s284] sm:$0xff]
        %v311 = vadd.f32 %v310, %v306
        %312 = vst [vmem:[%s284] sm:$0xff] %v311
        %s313 = sand.u32 %s124, 1
        %s314 = scalar_lea.sflag [#allocation4], %s313
        %s315 = sand.u32 %s124, 1
        %s316 = smul.addr %s315, 8
        %s317 = scalar_lea.vmem [#allocation7], %s316
        %s318 = sand.u32 %s152, 1
        %s319 = scalar_lea.sflag [#allocation9], %s318
        %s320 = sand.u32 %s152, 1
        %s321 = smul.addr %s320, 8
        %s322 = scalar_lea.vmem [#allocation8], %s321
        // Predicated region
        $region41: #{tpu_custom_call.1} parent=27 // pred_check
          %p323 = pneg %p134
        $region42: #{tpu_custom_call.1} parent=27 // pred_check_branch
          %325 = sbr.rel (%p323) target = $region44
        $region43: #{tpu_custom_call.1} parent=27 // pred_region
          %327 = vsyncadd %s314, 0
          %s328 = smul.addr %s32, 2
          %s329 = sadd.s32 %s33, %s328
          %s330 = smul.addr %s329, 8
          %s331 = scalar_lea.hbm %s2, %s330
          %s333 = sshll.u32 %s317, 4
          %s334 = int_to_ptr.vmem [resolvable:$true] %s333
          %s335 = sshll.u32 %s331, 4
          %s336 = int_to_ptr.hbm [resolvable:$true] %s335
          %338 = dma.vmem_to_hbm [thread:$0]  %s334, 128, %s336, %s314
        $region44: #{tpu_custom_call.1} parent=27 // pred_fallthru
          _
        // Predicated region
        $region45: #{tpu_custom_call.1} parent=27 // pred_check
          %p339 = pneg %p162
        $region46: #{tpu_custom_call.1} parent=27 // pred_check_branch
          %341 = sbr.rel (%p339) target = $region48
        $region47: #{tpu_custom_call.1} parent=27 // pred_region
          %343 = vsyncadd %s319, 0
          %s344 = smul.addr %s32, 2
          %s345 = sadd.s32 %s33, %s344
          %s346 = smul.addr %s345, 8
          %s347 = scalar_lea.hbm %s3, %s346
          %s349 = sshll.u32 %s322, 4
          %s350 = int_to_ptr.vmem [resolvable:$true] %s349
          %s351 = sshll.u32 %s347, 4
          %s352 = int_to_ptr.hbm [resolvable:$true] %s351
          %354 = dma.vmem_to_hbm [thread:$0]  %s350, 128, %s352, %s319
        $region48: #{tpu_custom_call.1} parent=27 // pred_fallthru
          _
      $region28: #{tpu_custom_call.1} parent=5 // pred_fallthru
        _
      %p355 = scmp.le.s32.totalorder 2, %s22
      // Predicated region
      $region49: #{tpu_custom_call.1} parent=5 // pred_check
        %p356 = pneg %p355
      $region50: #{tpu_custom_call.1} parent=5 // pred_check_branch
        %358 = sbr.rel (%p356) target = $region52
      $region51: #{tpu_custom_call.1} parent=5 // pred_region
        %s359 = ssub.s32 %s22, 2
        // Predicated region
        $region53: #{tpu_custom_call.1} parent=51 // pred_check
          %p360 = pneg %p140
        $region54: #{tpu_custom_call.1} parent=51 // pred_check_branch
          %362 = sbr.rel (%p360) target = $region56
        $region55: #{tpu_custom_call.1} parent=51 // pred_region
          %s363 = sand.u32 %s125, 1
          %s364 = scalar_lea.sflag [#allocation4], %s363
          %s365 = sand.u32 %s125, 1
          %s366 = smul.addr %s365, 8
          %s367 = scalar_lea.vmem [#allocation7], %s366
          %369 = dma.done %s364, 128
        $region56: #{tpu_custom_call.1} parent=51 // pred_fallthru
          _
        // Predicated region
        $region57: #{tpu_custom_call.1} parent=51 // pred_check
          %p370 = pneg %p168
        $region58: #{tpu_custom_call.1} parent=51 // pred_check_branch
          %372 = sbr.rel (%p370) target = $region60
        $region59: #{tpu_custom_call.1} parent=51 // pred_region
          %s373 = sand.u32 %s153, 1
          %s374 = scalar_lea.sflag [#allocation9], %s373
          %s375 = sand.u32 %s153, 1
          %s376 = smul.addr %s375, 8
          %s377 = scalar_lea.vmem [#allocation8], %s376
          %379 = dma.done %s374, 128
        $region60: #{tpu_custom_call.1} parent=51 // pred_fallthru
          _
      $region52: #{tpu_custom_call.1} parent=5 // pred_fallthru
        _
    $region6: #{tpu_custom_call.1} parent=1 // loop_footer
      %s26 = sadd.s32 1, %s22
    $region7: #{tpu_custom_call.1} parent=1 // loop_footer_branch
      %21 = sbr.rel target = $region3
    $region8: #{tpu_custom_call.1} parent=1 // loop_exit
      _
    %380 = vsyncpa [#allocation3], 1
    %s381 = scalar_lea.sflag [#allocation3], 1
    %382 = vsyncpa %s381, 1
    %383 = vsyncpa [#allocation6], 1
    %s384 = scalar_lea.sflag [#allocation6], 1
    %385 = vsyncpa %s384, 1
    %386 = vsyncpa [#allocation4], 1
    %s387 = scalar_lea.sflag [#allocation4], 1
    %388 = vsyncpa %s387, 1
    %389 = vsyncpa [#allocation9], 1
    %s390 = scalar_lea.sflag [#allocation9], 1
    %391 = vsyncpa %s390, 1

</llo_original>
